<compile_context>
chip_gen: v5e
topology: v5e:2x2
jax: 0.10.0
libtpu: 0.0.40
codegen_flags: <defaults>
</compile_context>

<pallas_src>
import math

import jax
import jax.numpy as jnp
from jax import lax
from jax.experimental import pallas as pl
from jax.experimental.pallas import tpu as pltpu

N_OUT = 64  # fc1 output features


# ----------------------------------------------------------------------------
# pltpu.roll direction probe (tiny one-off kernel, cached) -- guarantees the
# static shift amounts in the conv kernel are built in the right direction.
# ----------------------------------------------------------------------------
def _roll_probe_kernel(x_ref, o_ref):
    o_ref[...] = pltpu.roll(x_ref[...], 1, axis=1)


_ROLL_IS_NP = None


def _roll_is_np_convention() -> bool:
    """True if pltpu.roll(x, +1) moves elements toward higher lane indices
    (np.roll convention)."""
    global _ROLL_IS_NP
    if _ROLL_IS_NP is None:
        x = jnp.tile(jnp.arange(128, dtype=jnp.float32)[None, :], (8, 1))
        y = pl.pallas_call(
            _roll_probe_kernel,
            out_shape=jax.ShapeDtypeStruct((8, 128), jnp.float32),
        )(x)
        _ROLL_IS_NP = bool(jax.device_get(y)[0, 1] == 0.0)
    return _ROLL_IS_NP


# ----------------------------------------------------------------------------
# Fused conv1 + LIF1 + conv2 + LIF2 (one (batch, H-half) block per grid step)
# ----------------------------------------------------------------------------
def _make_conv_lif_kernel(np_roll: bool):
    def kernel(x_ref, w1_ref, b1_ref, w2_ref, b2_ref, spk2_ref):
        """x_ref:    (1, C1, Hb, W)     f32  VMEM (Hb = Hout + 4: halo included)
           w1_ref:   (C2*C1*9,)         f32  SMEM (flat OIHW)
           b1_ref:   (C2,)              f32  SMEM
           w2_ref:   (C3*C2*9,)         f32  SMEM (flat OIHW)
           b2_ref:   (C3,)              f32  SMEM
           spk2_ref: (1, C3, Hout, W2)  bf16 VMEM (0/1 spikes), W2 = W - 4
        """
        _, C1, Hb, W = x_ref.shape
        _, C3, Hout, W2 = spk2_ref.shape
        C2 = b1_ref.shape[0]
        H1 = Hb - 2  # conv1 output rows in this block

        def shift_left(plane, kw):
            # shifted[h, w] == plane[h, w + kw] on every column we keep; the
            # wrapped columns land only in the discarded right margin.
            if kw == 0:
                return plane
            amt = (W - kw) if np_roll else kw
            return pltpu.roll(plane, amt, axis=plane.ndim - 1)

        # ---- conv1 + LIF1: full-width tap slabs, lane offset via XLU roll,
        #      sublane slice for kh; hoisted out of the output-channel loop.
        taps1 = []
        for ci in range(C1):
            plane = x_ref[0, ci].astype(jnp.float32)                   # (Hb, W)
            rolled = [shift_left(plane, kw) for kw in range(3)]
            taps1.append([[rolled[kw][kh:kh + H1, :] for kw in range(3)]
                          for kh in range(3)])                         # (H1, W)

        spk1 = []
        for co in range(C2):
            acc = jnp.full((H1, W), b1_ref[co], dtype=jnp.float32)
            for ci in range(C1):
                for kh in range(3):
                    for kw in range(3):
                        wgt = w1_ref[((co * C1 + ci) * 3 + kh) * 3 + kw]
                        acc = acc + wgt * taps1[ci][kh][kw]
            # Leaky, one step from zero membrane: spk = (mem > threshold=1.0).
            # Columns >= W-2 hold wrapped garbage; they never reach the output.
            spk1.append((acc > 1.0).astype(jnp.float32))               # (H1, W)

        # ---- conv2 + LIF2 (same full-width + roll scheme on the spikes) ----
        taps2 = []
        for ci in range(C2):
            rolled = [shift_left(spk1[ci], kw) for kw in range(3)]
            taps2.append([[rolled[kw][kh:kh + Hout, :] for kw in range(3)]
                          for kh in range(3)])                         # (Hout, W)

        for co in range(C3):
            acc = jnp.full((Hout, W), b2_ref[co], dtype=jnp.float32)
            for ci in range(C2):
                for kh in range(3):
                    for kw in range(3):
                        wgt = w2_ref[((co * C2 + ci) * 3 + kh) * 3 + kw]
                        acc = acc + wgt * taps2[ci][kh][kw]
            # Narrow to the valid W2 lanes only at the final store.
            spk2_ref[0, co, :, :] = (acc[:, :W2] > 1.0).astype(spk2_ref.dtype)

    return kernel


def conv_lif_fused(x_nchw, w1_flat, b1, w2_flat, b2):
    B, C1, H, W = x_nchw.shape
    C3 = b2.shape[0]
    H2, W2 = H - 4, W - 4

    # Split each image into H-halves with a 4-row halo so both v7x TensorCores
    # get work even at batch 1 (kept only when the half stays 8-row aligned).
    h_splits = 2 if (H2 % 16 == 0) else 1
    h_out = H2 // h_splits
    h_blk = h_out + 4
    xs = jnp.stack([x_nchw[:, :, s * h_out:s * h_out + h_blk, :]
                    for s in range(h_splits)], axis=1)
    xs = xs.reshape(B * h_splits, C1, h_blk, W)

    kernel = _make_conv_lif_kernel(_roll_is_np_convention())
    smem = pl.BlockSpec(memory_space=pltpu.MemorySpace.SMEM)
    return pl.pallas_call(
        kernel,
        out_shape=jax.ShapeDtypeStruct((B, C3, H2, W2), jnp.bfloat16),
        grid=(B, h_splits),
        in_specs=[
            pl.BlockSpec((1, C1, h_blk, W),
                         lambda b, s: (b * h_splits + s, 0, 0, 0)),
            smem, smem, smem, smem,
        ],
        out_specs=pl.BlockSpec((1, C3, h_out, W2), lambda b, s: (b, 0, s, 0)),
        compiler_params=pltpu.CompilerParams(
            dimension_semantics=("parallel", "parallel"),
            # Headroom for the full-width f32 tap slabs at the real ~180x180
            # image size (v5e scoped default is 16 MiB); costless at toy size.
            vmem_limit_bytes=32 * 1024 * 1024),
    )(xs, w1_flat, b1, w2_flat, b2)


# ----------------------------------------------------------------------------
# fc1: K-tiled bf16 matmul, de-padded 64-wide output, f32 VMEM accumulator
# ----------------------------------------------------------------------------
def fc_kernel(x_ref, w_ref, b_ref, o_ref, acc_ref):
    k = pl.program_id(0)

    @pl.when(k == 0)
    def _():
        acc_ref[...] = jnp.broadcast_to(b_ref[...], acc_ref.shape)

    acc_ref[...] += jnp.dot(x_ref[...], w_ref[...],
                            preferred_element_type=jnp.float32)

    @pl.when(k == pl.num_programs(0) - 1)
    def _():
        o_ref[...] = acc_ref[...]


def _fc_tile_k(F):
    """K (reduction) tile for fc1.  Large tiles amortize the ~0.35us/step grid
    overhead (fc1 is weight-HBM-streaming bound at the real 381k-feature size:
    (16384, 64) bf16 = 2 MiB per tile, 4 MiB double-buffered).  Prefer an exact
    multiple-of-128 divisor of F so the activations need no zero padding."""
    cap = 16384 if F >= 4 * 16384 else max(128, (F // 3) // 128 * 128)
    best = None
    for tk in range(128, cap + 1, 128):
        if F % tk == 0:
            best = tk
    return best if best is not None else cap


def fc_tiled(flat_bf16, w_packed, b_row):
    """flat_bf16: (B, F) bf16 spikes; w_packed: (F_pad, 64) bf16; b_row: (1, 64) f32."""
    B, F = flat_bf16.shape
    F_pad, N = w_packed.shape
    tk = _fc_tile_k(F)
    assert F_pad % tk == 0 and F_pad >= F
    x = flat_bf16
    if F_pad != F:
        # TODO(synk): at production size, have the conv kernel write spk2 into
        # a buffer already padded to a tk multiple so this HBM pass disappears.
        x = jnp.pad(flat_bf16, ((0, 0), (0, F_pad - F)))
    return pl.pallas_call(
        fc_kernel,
        out_shape=jax.ShapeDtypeStruct((B, N), jnp.float32),
        grid=(F_pad // tk,),
        in_specs=[
            pl.BlockSpec((B, tk), lambda k: (0, k)),
            pl.BlockSpec((tk, N), lambda k: (k, 0)),
            pl.BlockSpec((1, N), lambda k: (0, 0)),
        ],
        out_specs=pl.BlockSpec((B, N), lambda k: (0, 0)),
        scratch_shapes=[pltpu.VMEM((B, N), jnp.float32)],
        compiler_params=pltpu.CompilerParams(
            dimension_semantics=("arbitrary",)),
    )(x, w_packed, b_row)


# ----------------------------------------------------------------------------
# Parameters (PyTorch conventions) + one-time repacking for the kernels
# ----------------------------------------------------------------------------
def xavier_uniform(key, shape, fan_in, fan_out):
    bound = math.sqrt(6.0 / (fan_in + fan_out))
    return jax.random.uniform(key, shape, jnp.float32, -bound, bound)


def init_params(key, H, W):
    k1, k2, k3 = jax.random.split(key, 3)
    w1 = xavier_uniform(k1, (6, 3, 3, 3), fan_in=3 * 9, fan_out=6 * 9)    # OIHW
    b1 = jnp.zeros((6,), jnp.float32)
    w2 = xavier_uniform(k2, (12, 6, 3, 3), fan_in=6 * 9, fan_out=12 * 9)  # OIHW
    b2 = jnp.zeros((12,), jnp.float32)
    feat = 12 * (H - 4) * (W - 4)   # 381000 in the original module
    wf = xavier_uniform(k3, (N_OUT, feat), fan_in=feat, fan_out=N_OUT)    # (out, in)
    bf = jnp.zeros((N_OUT,), jnp.float32)
    return (w1, b1, w2, b2, wf, bf)


def pack_params(params):
    """One-time repack: flat f32 conv weights (SMEM scalars); fc weight
    transposed to (F, 64) bf16 (no 128-lane padding), zero-padded along F only
    if the K tile does not divide F."""
    w1, b1, w2, b2, wf, bf = params
    F = wf.shape[1]
    tk = _fc_tile_k(F)
    F_pad = ((F + tk - 1) // tk) * tk
    wf_t = wf.T.astype(jnp.bfloat16)                      # (F, 64)
    if F_pad != F:
        wf_t = jnp.pad(wf_t, ((0, F_pad - F), (0, 0)))
    b_row = bf.reshape(1, N_OUT).astype(jnp.float32)
    return (w1.reshape(-1), b1, w2.reshape(-1), b2, wf_t, b_row)


# ----------------------------------------------------------------------------
# Forward pass + pure-JAX reference
# ----------------------------------------------------------------------------
def scnn_forward(x_nchw, packed):
    w1f, b1, w2f, b2, wf_packed, b_row = packed
    B = x_nchw.shape[0]
    spk2 = conv_lif_fused(x_nchw, w1f, b1, w2f, b2)   # (B, 12, H-4, W-4) bf16
    flat = spk2.reshape(B, -1)                        # == PyTorch NCHW flatten
    return fc_tiled(flat, wf_packed, b_row)           # (B, 64) f32


def scnn_reference(x_nchw, params):
    w1, b1, w2, b2, wf, bf = params
    dn = ("NCHW", "OIHW", "NCHW")
    z1 = lax.conv_general_dilated(x_nchw, w1, (1, 1), "VALID",
                                  dimension_numbers=dn) + b1[None, :, None, None]
    s1 = (z1 > 1.0).astype(jnp.float32)
    z2 = lax.conv_general_dilated(s1, w2, (1, 1), "VALID",
                                  dimension_numbers=dn) + b2[None, :, None, None]
    s2 = (z2 > 1.0).astype(jnp.float32)
    return s2.reshape(s2.shape[0], -1) @ wf.T + bf


if __name__ == "__main__":
    # Small stand-in for the real ~180x180 images: W=128 keeps every lane-axis
    # op on a full 128-lane tile; H=20 (H2=16) keeps the H-halo split active.
    B, C, H, W = 2, 3, 20, 128
    key = jax.random.PRNGKey(0)
    kx, kp = jax.random.split(key)

    # Scale the input so a reasonable fraction of units cross the threshold.
    x = 3.0 * jax.random.normal(kx, (B, C, H, W), jnp.float32)
    params = init_params(kp, H, W)
    packed = pack_params(params)

    _roll_is_np_convention()   # resolve the roll direction before tracing

    out = jax.jit(scnn_forward)(x, packed)
    jax.block_until_ready(out)

    assert out.shape == (B, N_OUT), out.shape
    assert out.dtype == jnp.float32

    ref = scnn_reference(x, params)
    err = float(jnp.max(jnp.abs(out - ref)))
    assert err < 5e-2, f"max |pallas - reference| = {err}"
    print("KERNEL_OK")
</pallas_src>

<mosaic_0001>
module attributes {stable_mosaic.version = 11 : i64} {
  func.func @_roll_probe_kernel(%arg0: memref<8x128xf32, #tpu.memory_space<vmem>>, %arg1: memref<8x128xf32, #tpu.memory_space<vmem>>) attributes {dimension_semantics = [], scalar_prefetch = 0 : i64, scratch_operands = 0 : i64, tpu.core_type = #tpu.core_type<tc>} {
    %c0 = arith.constant 0 : index
    %c0_0 = arith.constant 0 : index
    %0 = vector.load %arg0[%c0, %c0_0] : memref<8x128xf32, #tpu.memory_space<vmem>>, vector<8x128xf32>
    %c1_i32 = arith.constant 1 : i32
    %1 = tpu.dynamic_rotate %0 by %c1_i32 dim 1 : vector<8x128xf32>, i32 -> vector<8x128xf32>
    %c0_1 = arith.constant 0 : index
    %c0_2 = arith.constant 0 : index
    %2 = vector.load %arg1[%c0_1, %c0_2] : memref<8x128xf32, #tpu.memory_space<vmem>>, vector<8x128xf32>
    tpu.vector_store %arg1[%c0_1, %c0_2], %1 {strides = array<i32>} : memref<8x128xf32, #tpu.memory_space<vmem>>, vector<8x128xf32>,
    return
  }
}

</mosaic_0001>

<llo_original>
// kernel: tpu_custom_call.1
$region0: #{tpu_custom_call.1}
  #allocation0 [shape = 'u32[]', space=smem, size = 0x4, offset = 0x4, fixed_abs, tag = 'smem constant byte address 0x4 - core index']
  #allocation1 [shape = 'u32[72,128]{1,0:T(1,128)}', space=vmem, size = 0x9000, scoped, tag = 'internal scratch']
  %s0 = inlined_call_operand.hbm [shape: f32[8,128], index: 0, kind: input, shape index: {}]
  %s1 = inlined_call_operand.hbm [shape: f32[8,128], index: 1, kind: output, shape index: {}]
  %s2 = sld [smem:[#allocation0]]
  $region18: #{tpu_custom_call.1} parent=0
    _
  %s4 = ssub.s32 1, %s2
  %s5 = scalar_select 0, %s4, %s2
  $region1: #{tpu_custom_call.1} parent=0
    #allocation2 [shape = 'u8[4096]{0}', space=vmem, size = 0x1000, scoped, tag = 'input window, operand 0, single buffered']
    #allocation3 [shape = 's32[1]{0}', space=sflag, size = 0x4, scoped, tag = 'scoped memory for tpu_custom_call.1']
    #allocation4 [shape = 's32[1]{0}', space=sflag, size = 0x4, scoped, tag = 'scoped memory for tpu_custom_call.1']
    #allocation5 [shape = 'u8[4096]{0}', space=vmem, size = 0x1000, scoped, tag = 'output window, operand 0, single buffered']
    %6 = vsyncpa [#allocation3], 0
    %7 = vsyncpa [#allocation4], 0
    // Predicated region
    $region2: #{tpu_custom_call.1} parent=1 // pred_check
      _
    $region3: #{tpu_custom_call.1} parent=1 // pred_check_branch
      %9 = sbr.rel (0) target = $region5
    $region4: #{tpu_custom_call.1} parent=1 // pred_region
      %11 = vsyncadd [#allocation3], 0
      %s13 = sshll.u32 %s0, 4
      %s14 = int_to_ptr.hbm [resolvable:$true] %s13
      %s15 = sshll.u32 [#allocation2], 4
      %s16 = int_to_ptr.vmem [resolvable:$true] %s15
      %18 = dma.hbm_to_vmem [thread:$0]  %s14, 128, %s16, [#allocation3]
    $region5: #{tpu_custom_call.1} parent=1 // pred_fallthru
      _
    // Predicated region
    $region6: #{tpu_custom_call.1} parent=1 // pred_check
      _
    $region7: #{tpu_custom_call.1} parent=1 // pred_check_branch
      %20 = sbr.rel (0) target = $region9
    $region8: #{tpu_custom_call.1} parent=1 // pred_region
      %22 = dma.done [#allocation3], 128
    $region9: #{tpu_custom_call.1} parent=1 // pred_fallthru
      _
    %v23 = vld [vmem:[#allocation2] sm:$0xff]
    %24 = vrot.lane.b32.xlu0 %v23, 1
    %v25 = vpop.permute.xlu0 %24
    %26 = vst [vmem:[#allocation5] sm:$0xff] %v25
    // Predicated region
    $region10: #{tpu_custom_call.1} parent=1 // pred_check
      _
    $region11: #{tpu_custom_call.1} parent=1 // pred_check_branch
      %28 = sbr.rel (0) target = $region13
    $region12: #{tpu_custom_call.1} parent=1 // pred_region
      %30 = vsyncadd [#allocation4], 0
      %s32 = sshll.u32 [#allocation5], 4
      %s33 = int_to_ptr.vmem [resolvable:$true] %s32
      %s34 = sshll.u32 %s1, 4
      %s35 = int_to_ptr.hbm [resolvable:$true] %s34
      %37 = dma.vmem_to_hbm [thread:$0]  %s33, 128, %s35, [#allocation4]
    $region13: #{tpu_custom_call.1} parent=1 // pred_fallthru
      _
    // Predicated region
    $region14: #{tpu_custom_call.1} parent=1 // pred_check
      _
    $region15: #{tpu_custom_call.1} parent=1 // pred_check_branch
      %39 = sbr.rel (0) target = $region17
    $region16: #{tpu_custom_call.1} parent=1 // pred_region
      %41 = dma.done [#allocation4], 128
    $region17: #{tpu_custom_call.1} parent=1 // pred_fallthru
      _
    %42 = vsyncpa [#allocation3], 1
    %43 = vsyncpa [#allocation4], 1

</llo_original>
